<compile_context>
chip_gen: v7x
topology: tpu7x:2x2x1
jax: 0.10.0
libtpu: 0.0.40
codegen_flags: <defaults>
</compile_context>

<pallas_src>
import jax
import jax.numpy as jnp
from jax.experimental import pallas as pl
from jax.experimental.pallas import tpu as pltpu


_INV_SQRT2 = 0.7071067811865476


def _gelu_exact(x):
    # torch.nn.GELU default: 0.5 * x * (1 + erf(x / sqrt(2))).  Kept as exact erf
    # (f32 VALU polynomial) to preserve the module's numerics; the tanh/EUP approx
    # would be faster once lane-dense but deviates from torch defaults.
    return 0.5 * x * (1.0 + jax.lax.erf(x * jnp.float32(_INV_SQRT2)))


def mlp_kernel(*refs):
    """refs = (x_ref, W0, b0, W1, b1, ..., out_ref).

    Feature-major layout: the activation h is [features, batch_tile], so batch
    rides the 128-lane axis.  Weights are stored [fan_out, fan_in] in bf16, so each
    layer is one MXU matmul W @ h with f32 accumulation; bias [fan_out, 1] (f32)
    broadcasts along lanes.  GELU runs in f32, matmul inputs are cast to bf16.
    """
    x_ref, *param_refs, out_ref = refs
    n_layers = len(param_refs) // 2
    h = x_ref[...]                                   # bf16 [in_N, TB]
    for layer in range(n_layers):
        w = param_refs[2 * layer][...]               # bf16 [fan_out, fan_in]
        b = param_refs[2 * layer + 1][...]           # f32  [fan_out, 1]
        z = jnp.dot(w, h, preferred_element_type=jnp.float32) + b
        if layer < n_layers - 1:                     # no activation after output layer
            h = _gelu_exact(z).astype(jnp.bfloat16)
        else:
            out_ref[...] = z.astype(out_ref.dtype)


def init_params(key, in_N, depth, width, out_N):
    """torch.nn.Linear-style init. Weights stored (fan_out, fan_in), biases (fan_out, 1)."""
    dims = [in_N] + [width] * depth + [out_N]
    params = []
    for i in range(len(dims) - 1):
        key, kw, kb = jax.random.split(key, 3)
        fan_in, fan_out = dims[i], dims[i + 1]
        bound = 1.0 / float(fan_in) ** 0.5
        w = jax.random.uniform(kw, (fan_out, fan_in), jnp.float32, -bound, bound)
        b = jax.random.uniform(kb, (fan_out, 1), jnp.float32, -bound, bound)
        params.append((w, b))
    return params


def _round_up(x, m):
    return ((x + m - 1) // m) * m


def module_conv_forward(x, params, *, tile_b=512):
    """x: [B, in_N] f32; params: list of (W [fan_out, fan_in] f32, b [fan_out, 1] f32).

    Returns [B, out_N] f32.  Runs a 1-D batch-tiled grid (parallel => megacore on
    v7x); weights/biases stay resident in VMEM across all grid steps.
    """
    B, in_N = x.shape
    out_N = params[-1][0].shape[0]

    TB = min(_round_up(tile_b, 128), _round_up(B, 128))   # lane-aligned batch tile
    B_pad = _round_up(B, TB)
    grid = (B_pad // TB,)

    # Feature-major, batch on lanes; bf16 halves input DMA.  Zero-pad batch tail.
    xt = jnp.zeros((in_N, B_pad), jnp.bfloat16).at[:, :B].set(x.T.astype(jnp.bfloat16))

    flat = []
    in_specs = [pl.BlockSpec((in_N, TB), lambda i: (0, i))]
    for w, b in params:
        flat.extend([w.astype(jnp.bfloat16), b])
        in_specs.append(pl.BlockSpec(w.shape, lambda i: (0, 0)))   # resident across grid
        in_specs.append(pl.BlockSpec(b.shape, lambda i: (0, 0)))

    # VMEM budget: 2x double-buffered batch tiles + resident params, with headroom,
    # kept comfortably under v7x's 64 MiB.
    tile_bytes = 2 * (in_N * TB * 2 + out_N * TB * 4)
    param_bytes = sum(w.size * 2 + b.size * 4 for w, b in params)
    vmem_limit = min(max(8 * (tile_bytes + param_bytes), 16 << 20), 48 << 20)

    out = pl.pallas_call(
        mlp_kernel,
        out_shape=jax.ShapeDtypeStruct((out_N, B_pad), jnp.float32),
        grid=grid,
        in_specs=in_specs,
        out_specs=pl.BlockSpec((out_N, TB), lambda i: (0, i)),
        compiler_params=pltpu.CompilerParams(
            dimension_semantics=("parallel",),      # shard batch tiles across TCs (v7x)
            vmem_limit_bytes=int(vmem_limit),
        ),
    )(xt, *flat)

    return out[:, :B].T                              # back to [B, out_N]


def reference_forward_bf16(x, params):
    """Pure-JAX reference mirroring the kernel's bf16-MXU / f32-accumulate math."""
    h = x.T.astype(jnp.bfloat16)
    n = len(params)
    for i, (w, b) in enumerate(params):
        z = jnp.dot(w.astype(jnp.bfloat16), h, preferred_element_type=jnp.float32) + b
        h = _gelu_exact(z).astype(jnp.bfloat16) if i < n - 1 else z
    return h.T


def reference_forward_f32(x, params):
    """Full-f32 reference matching the torch module semantics (erf GELU)."""
    h = x
    n = len(params)
    for i, (w, b) in enumerate(params):
        h = h @ w.T + b.T
        if i < n - 1:
            h = _gelu_exact(h)
    return h


if __name__ == "__main__":
    # Shapes consistent with the module ctor: in_N features -> out_N outputs.
    in_N, depth, width, out_N = 4, 2, 32, 1

    key = jax.random.PRNGKey(0)
    key, kx = jax.random.split(key)
    params = init_params(key, in_N, depth, width, out_N)

    # Small sanity batch (single padded 128-lane tile, one grid step).
    B_small = 8
    x_small = jax.random.normal(kx, (B_small, in_N), jnp.float32)
    y_small = jax.block_until_ready(module_conv_forward(x_small, params))
    assert y_small.shape == (B_small, out_N)
    assert jnp.allclose(y_small, reference_forward_bf16(x_small, params),
                        atol=2e-2, rtol=2e-2), "mismatch vs bf16 reference (small batch)"
    assert jnp.allclose(y_small, reference_forward_f32(x_small, params),
                        atol=1e-1, rtol=1e-1), "mismatch vs f32 reference (small batch)"

    # Larger batch exercising the multi-tile pipelined / megacore-parallel grid path.
    key, kx2 = jax.random.split(key)
    B_big = 1024
    x_big = jax.random.normal(kx2, (B_big, in_N), jnp.float32)
    y_big = jax.block_until_ready(module_conv_forward(x_big, params, tile_b=512))
    assert y_big.shape == (B_big, out_N)
    assert jnp.allclose(y_big, reference_forward_bf16(x_big, params),
                        atol=2e-2, rtol=2e-2), "mismatch vs bf16 reference (big batch)"

    print("KERNEL_OK")
</pallas_src>

<mosaic_0001>
module attributes {stable_mosaic.version = 11 : i64} {
  func.func @mlp_kernel(%arg0: i32, %arg1: memref<4x128xbf16, #tpu.memory_space<vmem>>, %arg2: memref<32x4xbf16, #tpu.memory_space<vmem>>, %arg3: memref<32x1xf32, #tpu.memory_space<vmem>>, %arg4: memref<32x32xbf16, #tpu.memory_space<vmem>>, %arg5: memref<32x1xf32, #tpu.memory_space<vmem>>, %arg6: memref<1x32xbf16, #tpu.memory_space<vmem>>, %arg7: memref<1x1xf32, #tpu.memory_space<vmem>>, %arg8: memref<1x128xf32, #tpu.memory_space<vmem>>) attributes {dimension_semantics = [#tpu.dimension_semantics<parallel>], iteration_bounds = array<i64: 1>, scalar_prefetch = 0 : i64, scratch_operands = 0 : i64, tpu.core_type = #tpu.core_type<tc>, window_params = [{transform_indices = @transform_0, window_bounds = array<i64: 4, 128>}, {pipeline_mode = #tpu.pipeline_mode<synchronous>, transform_indices = @transform_1, window_bounds = array<i64: 32, 4>}, {pipeline_mode = #tpu.pipeline_mode<synchronous>, transform_indices = @transform_2, window_bounds = array<i64: 32, 1>}, {pipeline_mode = #tpu.pipeline_mode<synchronous>, transform_indices = @transform_3, window_bounds = array<i64: 32, 32>}, {pipeline_mode = #tpu.pipeline_mode<synchronous>, transform_indices = @transform_4, window_bounds = array<i64: 32, 1>}, {pipeline_mode = #tpu.pipeline_mode<synchronous>, transform_indices = @transform_5, window_bounds = array<i64: 1, 32>}, {pipeline_mode = #tpu.pipeline_mode<synchronous>, transform_indices = @transform_6, window_bounds = array<i64: 1, 1>}, {transform_indices = @transform_7, window_bounds = array<i64: 1, 128>}]} {
    %c0 = arith.constant 0 : index
    %c0_0 = arith.constant 0 : index
    %0 = vector.load %arg1[%c0, %c0_0] : memref<4x128xbf16, #tpu.memory_space<vmem>>, vector<4x128xbf16>
    %c0_1 = arith.constant 0 : index
    %c0_2 = arith.constant 0 : index
    %1 = vector.load %arg2[%c0_1, %c0_2] : memref<32x4xbf16, #tpu.memory_space<vmem>>, vector<32x4xbf16>
    %c0_3 = arith.constant 0 : index
    %c0_4 = arith.constant 0 : index
    %2 = vector.load %arg3[%c0_3, %c0_4] : memref<32x1xf32, #tpu.memory_space<vmem>>, vector<32x1xf32>
    %cst = arith.constant dense<0.000000e+00> : vector<32x128xf32>
    %3 = tpu.matmul %1, %0, %cst {dimension_numbers = #tpu.dot_dimension_numbers<[1], [0], [0], [1], [0, 0, 1, 1], [], []>} : vector<32x4xbf16>, vector<4x128xbf16>, vector<32x128xf32> -> vector<32x128xf32>
    %4 = vector.broadcast %2 : vector<32x1xf32> to vector<32x128xf32>
    %5 = arith.addf %3, %4 : vector<32x128xf32>
    %cst_5 = arith.constant 5.000000e-01 : f32
    %6 = vector.broadcast %cst_5 : f32 to vector<32x128xf32>
    %7 = arith.mulf %6, %5 : vector<32x128xf32>
    %cst_6 = arith.constant 0.707106769 : f32
    %8 = vector.broadcast %cst_6 : f32 to vector<32x128xf32>
    %9 = arith.mulf %5, %8 : vector<32x128xf32>
    %10 = math.erf %9 : vector<32x128xf32>
    %cst_7 = arith.constant 1.000000e+00 : f32
    %11 = vector.broadcast %cst_7 : f32 to vector<32x128xf32>
    %12 = arith.addf %11, %10 : vector<32x128xf32>
    %13 = arith.mulf %7, %12 : vector<32x128xf32>
    %14 = arith.truncf %13 : vector<32x128xf32> to vector<32x128xbf16>
    %c0_8 = arith.constant 0 : index
    %c0_9 = arith.constant 0 : index
    %15 = vector.load %arg4[%c0_8, %c0_9] : memref<32x32xbf16, #tpu.memory_space<vmem>>, vector<32x32xbf16>
    %c0_10 = arith.constant 0 : index
    %c0_11 = arith.constant 0 : index
    %16 = vector.load %arg5[%c0_10, %c0_11] : memref<32x1xf32, #tpu.memory_space<vmem>>, vector<32x1xf32>
    %cst_12 = arith.constant dense<0.000000e+00> : vector<32x128xf32>
    %17 = tpu.matmul %15, %14, %cst_12 {dimension_numbers = #tpu.dot_dimension_numbers<[1], [0], [0], [1], [0, 0, 1, 1], [], []>} : vector<32x32xbf16>, vector<32x128xbf16>, vector<32x128xf32> -> vector<32x128xf32>
    %18 = vector.broadcast %16 : vector<32x1xf32> to vector<32x128xf32>
    %19 = arith.addf %17, %18 : vector<32x128xf32>
    %cst_13 = arith.constant 5.000000e-01 : f32
    %20 = vector.broadcast %cst_13 : f32 to vector<32x128xf32>
    %21 = arith.mulf %20, %19 : vector<32x128xf32>
    %cst_14 = arith.constant 0.707106769 : f32
    %22 = vector.broadcast %cst_14 : f32 to vector<32x128xf32>
    %23 = arith.mulf %19, %22 : vector<32x128xf32>
    %24 = math.erf %23 : vector<32x128xf32>
    %cst_15 = arith.constant 1.000000e+00 : f32
    %25 = vector.broadcast %cst_15 : f32 to vector<32x128xf32>
    %26 = arith.addf %25, %24 : vector<32x128xf32>
    %27 = arith.mulf %21, %26 : vector<32x128xf32>
    %28 = arith.truncf %27 : vector<32x128xf32> to vector<32x128xbf16>
    %c0_16 = arith.constant 0 : index
    %c0_17 = arith.constant 0 : index
    %29 = vector.load %arg6[%c0_16, %c0_17] : memref<1x32xbf16, #tpu.memory_space<vmem>>, vector<1x32xbf16>
    %c0_18 = arith.constant 0 : index
    %c0_19 = arith.constant 0 : index
    %30 = vector.load %arg7[%c0_18, %c0_19] : memref<1x1xf32, #tpu.memory_space<vmem>>, vector<1x1xf32>
    %cst_20 = arith.constant dense<0.000000e+00> : vector<1x128xf32>
    %31 = tpu.matmul %29, %28, %cst_20 {dimension_numbers = #tpu.dot_dimension_numbers<[1], [0], [0], [1], [0, 0, 1, 1], [], []>} : vector<1x32xbf16>, vector<32x128xbf16>, vector<1x128xf32> -> vector<1x128xf32>
    %32 = vector.broadcast %30 : vector<1x1xf32> to vector<1x128xf32>
    %33 = arith.addf %31, %32 : vector<1x128xf32>
    %c0_21 = arith.constant 0 : index
    %c0_22 = arith.constant 0 : index
    %34 = vector.load %arg8[%c0_21, %c0_22] : memref<1x128xf32, #tpu.memory_space<vmem>>, vector<1x128xf32>
    tpu.vector_store %arg8[%c0_21, %c0_22], %33 {strides = array<i32>} : memref<1x128xf32, #tpu.memory_space<vmem>>, vector<1x128xf32>,
    return
  }
  func.func @transform_0(%arg0: i32) -> (i32, i32) {
    %c0_i32 = arith.constant 0 : i32
    %c0_i32_0 = arith.constant 0 : i32
    return %c0_i32, %arg0 : i32, i32
  }
  func.func @transform_1(%arg0: i32) -> (i32, i32) {
    %c0_i32 = arith.constant 0 : i32
    %c0_i32_0 = arith.constant 0 : i32
    %c0_i32_1 = arith.constant 0 : i32
    return %c0_i32, %c0_i32_0 : i32, i32
  }
  func.func @transform_2(%arg0: i32) -> (i32, i32) {
    %c0_i32 = arith.constant 0 : i32
    %c0_i32_0 = arith.constant 0 : i32
    %c0_i32_1 = arith.constant 0 : i32
    return %c0_i32, %c0_i32_0 : i32, i32
  }
  func.func @transform_3(%arg0: i32) -> (i32, i32) {
    %c0_i32 = arith.constant 0 : i32
    %c0_i32_0 = arith.constant 0 : i32
    %c0_i32_1 = arith.constant 0 : i32
    return %c0_i32, %c0_i32_0 : i32, i32
  }
  func.func @transform_4(%arg0: i32) -> (i32, i32) {
    %c0_i32 = arith.constant 0 : i32
    %c0_i32_0 = arith.constant 0 : i32
    %c0_i32_1 = arith.constant 0 : i32
    return %c0_i32, %c0_i32_0 : i32, i32
  }
  func.func @transform_5(%arg0: i32) -> (i32, i32) {
    %c0_i32 = arith.constant 0 : i32
    %c0_i32_0 = arith.constant 0 : i32
    %c0_i32_1 = arith.constant 0 : i32
    return %c0_i32, %c0_i32_0 : i32, i32
  }
  func.func @transform_6(%arg0: i32) -> (i32, i32) {
    %c0_i32 = arith.constant 0 : i32
    %c0_i32_0 = arith.constant 0 : i32
    %c0_i32_1 = arith.constant 0 : i32
    return %c0_i32, %c0_i32_0 : i32, i32
  }
  func.func @transform_7(%arg0: i32) -> (i32, i32) {
    %c0_i32 = arith.constant 0 : i32
    %c0_i32_0 = arith.constant 0 : i32
    return %c0_i32, %arg0 : i32, i32
  }
}

</mosaic_0001>

<llo_original>
// kernel: tpu_custom_call.1
$region0: #{tpu_custom_call.1}
  #allocation0 [shape = 'u32[]', space=smem, size = 0x4, offset = 0x4, fixed_abs, tag = 'smem constant byte address 0x4 - core index']
  #allocation1 [shape = 'u32[144,128]{1,0:T(1,128)}', space=vmem, size = 0x12000, scoped, tag = 'internal scratch']
  #allocation2 [shape = 'f32[1,1]{1,0:T(1,128)S(1)}', space=vmem, size = 0x200, scoped, tag = 'scoped memory for tpu_custom_call.1']
  %s0 = inlined_call_operand.vmem [shape: bf16[4,128], index: 0, kind: input, shape index: {}]
  %s1 = inlined_call_operand.vmem [shape: bf16[32,4], index: 1, kind: input, shape index: {}]
  %s2 = inlined_call_operand.vmem [shape: f32[32,1], index: 2, kind: input, shape index: {}]
  %s3 = inlined_call_operand.vmem [shape: bf16[32,32], index: 3, kind: input, shape index: {}]
  %s4 = inlined_call_operand.vmem [shape: f32[32,1], index: 4, kind: input, shape index: {}]
  %s5 = inlined_call_operand.vmem [shape: bf16[1,32], index: 5, kind: input, shape index: {}]
  %s6 = inlined_call_operand.<no memory space> [shape: f32[1,1], index: 6, kind: input, shape index: {}]
  %s7 = inlined_call_operand.hbm [shape: f32[1,128], index: 7, kind: output, shape index: {}]
  %s8 = sld [smem:[#allocation0]]
  $region38: #{tpu_custom_call.1} parent=0
    _
  %s10 = ssub.s32 1, %s8
  %s11 = scalar_select 0, %s10, %s8
  %v12 = vstv %s6
  %13 = vst [vmem:[#allocation2] sm:$0x1] %v12
  $region1: #{tpu_custom_call.1} parent=0
    #allocation3 [shape = 'u8[512]{0}', space=vmem, size = 0x400, scoped, tag = 'output window, operand 0, single buffered']
    #allocation4 [shape = 's32[1]{0}', space=sflag, size = 0x4, scoped, tag = 'scoped memory for tpu_custom_call.1']
    %14 = vsyncpa [#allocation4], 0
    // Predicated region
    $region2: #{tpu_custom_call.1} parent=1 // pred_check
      _
    $region3: #{tpu_custom_call.1} parent=1 // pred_check_branch
      %16 = sbr.rel (0) target = $region5
    $region4: #{tpu_custom_call.1} parent=1 // pred_region
      _
    $region5: #{tpu_custom_call.1} parent=1 // pred_fallthru
      _
    // Predicated region
    $region6: #{tpu_custom_call.1} parent=1 // pred_check
      _
    $region7: #{tpu_custom_call.1} parent=1 // pred_check_branch
      %18 = sbr.rel (0) target = $region9
    $region8: #{tpu_custom_call.1} parent=1 // pred_region
      _
    $region9: #{tpu_custom_call.1} parent=1 // pred_fallthru
      _
    // Predicated region
    $region10: #{tpu_custom_call.1} parent=1 // pred_check
      _
    $region11: #{tpu_custom_call.1} parent=1 // pred_check_branch
      %20 = sbr.rel (0) target = $region13
    $region12: #{tpu_custom_call.1} parent=1 // pred_region
      _
    $region13: #{tpu_custom_call.1} parent=1 // pred_fallthru
      _
    // Predicated region
    $region14: #{tpu_custom_call.1} parent=1 // pred_check
      _
    $region15: #{tpu_custom_call.1} parent=1 // pred_check_branch
      %22 = sbr.rel (0) target = $region17
    $region16: #{tpu_custom_call.1} parent=1 // pred_region
      _
    $region17: #{tpu_custom_call.1} parent=1 // pred_fallthru
      _
    // Predicated region
    $region18: #{tpu_custom_call.1} parent=1 // pred_check
      _
    $region19: #{tpu_custom_call.1} parent=1 // pred_check_branch
      %24 = sbr.rel (0) target = $region21
    $region20: #{tpu_custom_call.1} parent=1 // pred_region
      _
    $region21: #{tpu_custom_call.1} parent=1 // pred_fallthru
      _
    // Predicated region
    $region22: #{tpu_custom_call.1} parent=1 // pred_check
      _
    $region23: #{tpu_custom_call.1} parent=1 // pred_check_branch
      %26 = sbr.rel (0) target = $region25
    $region24: #{tpu_custom_call.1} parent=1 // pred_region
      _
    $region25: #{tpu_custom_call.1} parent=1 // pred_fallthru
      _
    // Predicated region
    $region26: #{tpu_custom_call.1} parent=1 // pred_check
      _
    $region27: #{tpu_custom_call.1} parent=1 // pred_check_branch
      %28 = sbr.rel (0) target = $region29
    $region28: #{tpu_custom_call.1} parent=1 // pred_region
      _
    $region29: #{tpu_custom_call.1} parent=1 // pred_fallthru
      _
    %v30 = vld [vmem:[%s0] sm:$0x3]
    %v31 = vld [vmem:[%s1] sm:$0xf]
    %v32 = vld [vmem:[%s1 + $0x4] sm:$0xf]
    %v33 = vld [vmem:[%s1 + $0x8] sm:$0xf]
    %v34 = vld [vmem:[%s1 + $0xc] sm:$0xf]
    %v35 = vld [vmem:[%s2] sm:$0xff]
    %v36 = vld [vmem:[%s2 + $0x8] sm:$0xff]
    %v37 = vld [vmem:[%s2 + $0x10] sm:$0xff]
    %v38 = vld [vmem:[%s2 + $0x18] sm:$0xff]
    %40 = vset.pattern.permute.xlu0 0
    %41 = vperm.xlu0 %40, %v35
    %v42 = vpop.permute.xlu0 %41
    %45 = vset.pattern.permute.xlu0 0
    %46 = vperm.xlu0 %45, %v36
    %v47 = vpop.permute.xlu0 %46
    %50 = vset.pattern.permute.xlu0 0
    %51 = vperm.xlu0 %50, %v37
    %v52 = vpop.permute.xlu0 %51
    %55 = vset.pattern.permute.xlu0 0
    %56 = vperm.xlu0 %55, %v38
    %v57 = vpop.permute.xlu0 %56
    %v63 = vunpack.c.l.b16 %v31
    %v64 = vunpack.c.l.b16 %v32
    %v65 = vunpack.c.l.b16 %v33
    %v66 = vunpack.c.l.b16 %v34
    %v67 = vpack.c.b16 %v64, %v63
    %v68 = vpack.c.b16 %v66, %v65
    %vm69 = vcmask 31744
    %v71 = vsel %vm69, %v67, 0
    %v74 = vsel %vm69, %v68, 0
    %vm76 = vcmask 1041408
    %v78 = vsel %vm76, %v30, 0
    %80 = vmatprep.subr.bf16.mxu0 0
    %81 = vmatpush1.bf16.msra.mxu0 %v78
    %82 = vmatprep.subr.bf16.mxu0 0
    %83 = vmatpush1.bf16.msra.mxu0 0
    %84 = vmatprep.subr.bf16.mxu0 0
    %85 = vmatpush1.bf16.msra.mxu0 0
    %86 = vmatprep.subr.bf16.mxu0 0
    %87 = vmatpush1.bf16.msra.mxu0 0
    %88 = vmatprep.subr.bf16.mxu0 0
    %89 = vmatpush1.bf16.msra.mxu0 0
    %90 = vmatprep.subr.bf16.mxu0 0
    %91 = vmatpush1.bf16.msra.mxu0 0
    %92 = vmatprep.subr.bf16.mxu0 0
    %93 = vmatpush1.bf16.msra.mxu0 0
    %94 = vmatprep.subr.bf16.mxu0 0
    %95 = vmatpush1.bf16.msra.mxu0 0
    %96 = vmatprep.subr.bf16.mxu0 0
    %97 = vmatpush1.bf16.msra.mxu0 0
    %98 = vmatprep.subr.bf16.mxu0 0
    %99 = vmatpush1.bf16.msra.mxu0 0
    %100 = vmatprep.subr.bf16.mxu0 0
    %101 = vmatpush1.bf16.msra.mxu0 0
    %102 = vmatprep.subr.bf16.mxu0 0
    %103 = vmatpush1.bf16.msra.mxu0 0
    %104 = vmatprep.subr.bf16.mxu0 0
    %105 = vmatpush1.bf16.msra.mxu0 0
    %106 = vmatprep.subr.bf16.mxu0 0
    %107 = vmatpush1.bf16.msra.mxu0 0
    %108 = vmatprep.subr.bf16.mxu0 0
    %109 = vmatpush1.bf16.msra.mxu0 0
    %110 = vmatprep.subr.bf16.mxu0 0
    %111 = vmatpush1.bf16.msra.mxu0 0
    %112 = vmatprep.mubr.bf16.mxu0 0
    %113 = vmatmul.mubr.bf16.gmra.mrb[0].mxu0 %v71
    %v114 = vpop.f32.mrb[0].mxu0
    %v115 = vadd.f32 %v42, %v114
    %v116 = vpop.f32.mrb[0].mxu0
    %v117 = vpop.f32.mrb[0].mxu0
    %v118 = vadd.f32 %v47, %v117
    %v119 = vpop.f32.mrb[0].mxu0
    %120 = vmatprep.mubr.bf16.mxu0 0
    %121 = vmatmul.mubr.bf16.gmra.mrb[0].mxu0 %v74
    %v122 = vpop.f32.mrb[0].mxu0
    %v123 = vadd.f32 %v52, %v122
    %v124 = vpop.f32.mrb[0].mxu0
    %v125 = vpop.f32.mrb[0].mxu0
    %v126 = vadd.f32 %v57, %v125
    %v127 = vpop.f32.mrb[0].mxu0
    %128 = vdwg.mxu0
    %v129 = vmul.f32 %v115, 0.5
    %v130 = vmul.f32 %v118, 0.5
    %v131 = vmul.f32 %v123, 0.5
    %v132 = vmul.f32 %v126, 0.5
    %v133 = vmul.f32 %v115, 0.70710677
    %v134 = vmul.f32 %v118, 0.70710677
    %v135 = vmul.f32 %v123, 0.70710677
    %v136 = vmul.f32 %v126, 0.70710677
    %v137 = verf.f32.pop %v133
    %v138 = verf.f32.pop %v134
    %v139 = verf.f32.pop %v135
    %v140 = verf.f32.pop %v136
    %v141 = vadd.f32 %v137, 1.0
    %v142 = vadd.f32 %v138, 1.0
    %v143 = vadd.f32 %v139, 1.0
    %v144 = vadd.f32 %v140, 1.0
    %v145 = vmul.f32 %v129, %v141
    %v146 = vmul.f32 %v130, %v142
    %v147 = vmul.f32 %v131, %v143
    %v148 = vmul.f32 %v132, %v144
    %v149 = vpack.c.bf16 %v146, %v145
    %v150 = vpack.c.bf16 %v148, %v147
    %v151 = vld [vmem:[%s3] sm:$0xf]
    %v152 = vld [vmem:[%s3 + $0x4] sm:$0xf]
    %v153 = vld [vmem:[%s3 + $0x8] sm:$0xf]
    %v154 = vld [vmem:[%s3 + $0xc] sm:$0xf]
    %v155 = vld [vmem:[%s4] sm:$0xff]
    %v156 = vld [vmem:[%s4 + $0x8] sm:$0xff]
    %v157 = vld [vmem:[%s4 + $0x10] sm:$0xff]
    %v158 = vld [vmem:[%s4 + $0x18] sm:$0xff]
    %160 = vset.pattern.permute.xlu0 0
    %161 = vperm.xlu0 %160, %v155
    %v162 = vpop.permute.xlu0 %161
    %165 = vset.pattern.permute.xlu0 0
    %166 = vperm.xlu0 %165, %v156
    %v167 = vpop.permute.xlu0 %166
    %170 = vset.pattern.permute.xlu0 0
    %171 = vperm.xlu0 %170, %v157
    %v172 = vpop.permute.xlu0 %171
    %175 = vset.pattern.permute.xlu0 0
    %176 = vperm.xlu0 %175, %v158
    %v177 = vpop.permute.xlu0 %176
    %v183 = vunpack.c.l.b16 %v151
    %v184 = vunpack.c.l.b16 %v152
    %v185 = vunpack.c.l.b16 %v153
    %v186 = vunpack.c.l.b16 %v154
    %v187 = vpack.c.b16 %v184, %v183
    %v188 = vpack.c.b16 %v186, %v185
    %vm189 = vcmask 261120
    %v191 = vsel %vm189, %v187, 0
    %v194 = vsel %vm189, %v188, 0
    %196 = vmatprep.subr.bf16.mxu0 0
    %197 = vmatpush1.bf16.msra.mxu0 %v149
    %198 = vmatprep.subr.bf16.mxu0 0
    %199 = vmatpush1.bf16.msra.mxu0 %v150
    %200 = vmatprep.subr.bf16.mxu0 0
    %201 = vmatpush1.bf16.msra.mxu0 0
    %202 = vmatprep.subr.bf16.mxu0 0
    %203 = vmatpush1.bf16.msra.mxu0 0
    %204 = vmatprep.subr.bf16.mxu0 0
    %205 = vmatpush1.bf16.msra.mxu0 0
    %206 = vmatprep.subr.bf16.mxu0 0
    %207 = vmatpush1.bf16.msra.mxu0 0
    %208 = vmatprep.subr.bf16.mxu0 0
    %209 = vmatpush1.bf16.msra.mxu0 0
    %210 = vmatprep.subr.bf16.mxu0 0
    %211 = vmatpush1.bf16.msra.mxu0 0
    %212 = vmatprep.subr.bf16.mxu0 0
    %213 = vmatpush1.bf16.msra.mxu0 0
    %214 = vmatprep.subr.bf16.mxu0 0
    %215 = vmatpush1.bf16.msra.mxu0 0
    %216 = vmatprep.subr.bf16.mxu0 0
    %217 = vmatpush1.bf16.msra.mxu0 0
    %218 = vmatprep.subr.bf16.mxu0 0
    %219 = vmatpush1.bf16.msra.mxu0 0
    %220 = vmatprep.subr.bf16.mxu0 0
    %221 = vmatpush1.bf16.msra.mxu0 0
    %222 = vmatprep.subr.bf16.mxu0 0
    %223 = vmatpush1.bf16.msra.mxu0 0
    %224 = vmatprep.subr.bf16.mxu0 0
    %225 = vmatpush1.bf16.msra.mxu0 0
    %226 = vmatprep.subr.bf16.mxu0 0
    %227 = vmatpush1.bf16.msra.mxu0 0
    %228 = vmatprep.mubr.bf16.mxu0 0
    %229 = vmatmul.mubr.bf16.gmra.mrb[0].mxu0 %v191
    %v230 = vpop.f32.mrb[0].mxu0
    %v231 = vadd.f32 %v162, %v230
    %v232 = vpop.f32.mrb[0].mxu0
    %v233 = vpop.f32.mrb[0].mxu0
    %v234 = vadd.f32 %v167, %v233
    %v235 = vpop.f32.mrb[0].mxu0
    %236 = vmatprep.mubr.bf16.mxu0 0
    %237 = vmatmul.mubr.bf16.gmra.mrb[0].mxu0 %v194
    %v238 = vpop.f32.mrb[0].mxu0
    %v239 = vadd.f32 %v172, %v238
    %v240 = vpop.f32.mrb[0].mxu0
    %v241 = vpop.f32.mrb[0].mxu0
    %v242 = vadd.f32 %v177, %v241
    %v243 = vpop.f32.mrb[0].mxu0
    %244 = vdwg.mxu0
    %v245 = vmul.f32 %v231, 0.5
    %v246 = vmul.f32 %v234, 0.5
    %v247 = vmul.f32 %v239, 0.5
    %v248 = vmul.f32 %v242, 0.5
    %v249 = vmul.f32 %v231, 0.70710677
    %v250 = vmul.f32 %v234, 0.70710677
    %v251 = vmul.f32 %v239, 0.70710677
    %v252 = vmul.f32 %v242, 0.70710677
    %v253 = verf.f32.pop %v249
    %v254 = verf.f32.pop %v250
    %v255 = verf.f32.pop %v251
    %v256 = verf.f32.pop %v252
    %v257 = vadd.f32 %v253, 1.0
    %v258 = vadd.f32 %v254, 1.0
    %v259 = vadd.f32 %v255, 1.0
    %v260 = vadd.f32 %v256, 1.0
    %v261 = vmul.f32 %v245, %v257
    %v262 = vmul.f32 %v246, %v258
    %v263 = vmul.f32 %v247, %v259
    %v264 = vmul.f32 %v248, %v260
    %v265 = vpack.c.bf16 %v262, %v261
    %v266 = vpack.c.bf16 %v264, %v263
    %v267 = vld [vmem:[%s5] sm:$0x1]
    %v268 = vld [vmem:[#allocation2] sm:$0x1]
    %270 = vset.pattern.permute.xlu0 0
    %271 = vperm.xlu0 %270, %v268
    %v272 = vpop.permute.xlu0 %271
    %v274 = vlaneseq
    %v275 = vshrl.u32 %v274, 7
    %v276 = vsub.s32 0, %v275
    %v277 = vrot.slane %v272, %v276
    %v279 = vsel %vm189, %v267, 0
    %281 = vmatprep.subr.bf16.mxu0 0
    %282 = vmatpush1.bf16.msra.mxu0 %v265
    %283 = vmatprep.subr.bf16.mxu0 0
    %284 = vmatpush1.bf16.msra.mxu0 %v266
    %285 = vmatprep.subr.bf16.mxu0 0
    %286 = vmatpush1.bf16.msra.mxu0 0
    %287 = vmatprep.subr.bf16.mxu0 0
    %288 = vmatpush1.bf16.msra.mxu0 0
    %289 = vmatprep.subr.bf16.mxu0 0
    %290 = vmatpush1.bf16.msra.mxu0 0
    %291 = vmatprep.subr.bf16.mxu0 0
    %292 = vmatpush1.bf16.msra.mxu0 0
    %293 = vmatprep.subr.bf16.mxu0 0
    %294 = vmatpush1.bf16.msra.mxu0 0
    %295 = vmatprep.subr.bf16.mxu0 0
    %296 = vmatpush1.bf16.msra.mxu0 0
    %297 = vmatprep.subr.bf16.mxu0 0
    %298 = vmatpush1.bf16.msra.mxu0 0
    %299 = vmatprep.subr.bf16.mxu0 0
    %300 = vmatpush1.bf16.msra.mxu0 0
    %301 = vmatprep.subr.bf16.mxu0 0
    %302 = vmatpush1.bf16.msra.mxu0 0
    %303 = vmatprep.subr.bf16.mxu0 0
    %304 = vmatpush1.bf16.msra.mxu0 0
    %305 = vmatprep.subr.bf16.mxu0 0
    %306 = vmatpush1.bf16.msra.mxu0 0
    %307 = vmatprep.subr.bf16.mxu0 0
    %308 = vmatpush1.bf16.msra.mxu0 0
    %309 = vmatprep.subr.bf16.mxu0 0
    %310 = vmatpush1.bf16.msra.mxu0 0
    %311 = vmatprep.subr.bf16.mxu0 0
    %312 = vmatpush1.bf16.msra.mxu0 0
    %313 = vmatprep.mubr.bf16.mxu0 0
    %314 = vmatmul.mubr.bf16.gmra.mrb[0].mxu0 %v279
    %v315 = vpop.f32.mrb[0].mxu0
    %v316 = vadd.f32 %v277, %v315
    %v317 = vpop.f32.mrb[0].mxu0
    %v318 = vpop.f32.mrb[0].mxu0
    %v319 = vpop.f32.mrb[0].mxu0
    %320 = vdwg.mxu0
    %321 = vst [vmem:[#allocation3] sm:$0x1] %v316
    // Predicated region
    $region30: #{tpu_custom_call.1} parent=1 // pred_check
      _
    $region31: #{tpu_custom_call.1} parent=1 // pred_check_branch
      %323 = sbr.rel (0) target = $region33
    $region32: #{tpu_custom_call.1} parent=1 // pred_region
      %s325 = ssub.s32 16, 16
      %326 = vsyncadd [#allocation4], %s325
      %s328 = sshll.u32 [#allocation3], 4
      %s329 = int_to_ptr.vmem [resolvable:$true] %s328
      %331 = dma.vmem_to_hbm [thread:$0]  %s329, 16, %s7, [#allocation4]
    $region33: #{tpu_custom_call.1} parent=1 // pred_fallthru
      _
    // Predicated region
    $region34: #{tpu_custom_call.1} parent=1 // pred_check
      _
    $region35: #{tpu_custom_call.1} parent=1 // pred_check_branch
      %333 = sbr.rel (0) target = $region37
    $region36: #{tpu_custom_call.1} parent=1 // pred_region
      %334 = dma.done [#allocation4], 16
    $region37: #{tpu_custom_call.1} parent=1 // pred_fallthru
      _
    %335 = vsyncpa [#allocation4], 1

</llo_original>
